<compile_context>
chip_gen: v6e
topology: v6e:2x2x1
jax: 0.10.0
libtpu: 0.0.40
codegen_flags: <defaults>
</compile_context>

<pallas_src>
import functools

import jax
import jax.numpy as jnp
from jax import lax
from jax.experimental import pallas as pl
from jax.experimental.pallas import tpu as pltpu

_EPS = 1e-8                                # torch cosine_similarity default eps
_SUBLANE = 8
_D_SLICE = 128                             # lanes per in-kernel reduction step
_TARGET_BLOCK_BYTES = 8 * 1024 * 1024      # ~8 MiB blocks: step overhead <10% on v6e/v7x
_VMEM_SIZING_BUDGET = 32 * 1024 * 1024     # sizing model: 2*block + ~4 f32 work slabs
_VMEM_LIMIT_BYTES = 48 * 1024 * 1024       # compiler cap (headroom over the model)


def _round_up(x, m):
    return ((x + m - 1) // m) * m


def _choose_tiles(num_docs, num_chunks, dim, itemsize, max_block_bytes):
    """Pick (doc, chunk) tile sizes for one auto-pipelined VMEM block."""
    bytes_per_row = dim * itemsize                   # one chunk embedding
    # VMEM model per grid step: 2x the double-buffered input block plus ~4 live f32
    # work slabs of shape (rows, _D_SLICE) from the in-kernel reduction loop.
    rows_vmem = _VMEM_SIZING_BUDGET // (2 * bytes_per_row + 4 * _D_SLICE * 4)
    rows_tgt = max(1, max_block_bytes // bytes_per_row)
    rows = max(1, min(rows_vmem, rows_tgt))

    docs_per_block = rows // num_chunks
    if docs_per_block >= num_docs:
        tile_nd, tile_nc = num_docs, num_chunks
    elif docs_per_block >= _SUBLANE:
        tile_nd, tile_nc = (docs_per_block // _SUBLANE) * _SUBLANE, num_chunks
    else:
        # Very long documents: even a handful of docs overflow the block budget, so
        # tile the chunk axis too (running product is carried in VMEM scratch).
        tile_nd = num_docs if num_docs < _SUBLANE else _SUBLANE
        tile_nc = max(_SUBLANE, ((rows // tile_nd) // _SUBLANE) * _SUBLANE)
        if tile_nc >= num_chunks:
            tile_nc = num_chunks

    # Feed both v7x TensorCores: split the "parallel" doc axis into >=2 (ideally 4)
    # tiles whenever there are enough documents, even if everything fits one block.
    if tile_nd == num_docs and tile_nc == num_chunks and num_docs >= 2 * _SUBLANE:
        want = 4 if num_docs >= 4 * _SUBLANE else 2
        cand = _round_up(pl.cdiv(num_docs, want), _SUBLANE)
        if cand < num_docs:
            tile_nd = cand
    return tile_nd, tile_nc


def _prod_last_axis(x):
    """Exact product over the last axis via a pairwise tree of contiguous lane
    slices (avoids relying on a multiplicative cross-lane reduce)."""
    leftovers = []
    while x.shape[-1] > 1:
        h = x.shape[-1] // 2
        if x.shape[-1] % 2:
            leftovers.append(x[:, -1:])
        x = x[:, :h] * x[:, h:2 * h]
    for extra in leftovers:
        x = x * extra
    return x                                          # (rows, 1)


def _similarity_kernel(q_ref, chunks_ref, lex_ref, w_ref, b_ref, out_ref,
                       prod_ref, *, num_chunks, mask_tail):
    # q_ref:      (1, D)               query embedding (native dtype)
    # chunks_ref: (tile_nd, tile_nc, D) chunk embeddings (native dtype)
    # lex_ref:    (tile_nd, 1)         lexical / topic similarity per doc
    # w_ref:      (2,)  SMEM           Linear(2 -> 1) weight
    # b_ref:      (1,)  SMEM           Linear(2 -> 1) bias
    # out_ref:    (tile_nd, 1)         sigmoid(combined score)
    # prod_ref:   (tile_nd, 1) VMEM    running prod(1 - sim) across chunk tiles
    j = pl.program_id(1)

    @pl.when(j == 0)
    def _init():                                      # fresh product per doc tile
        prod_ref[...] = jnp.ones_like(prod_ref)

    t, l, d = chunks_ref.shape
    dots = jnp.zeros((t, l), jnp.float32)             # chunk . query
    csq = jnp.zeros((t, l), jnp.float32)              # ||chunk||^2
    qsq = jnp.zeros((1, 1), jnp.float32)              # ||query||^2
    # Batched over the whole (t, l, D) slab; accumulate over lane-aligned 128-wide
    # slices of D so the f32 upcast temporaries stay small relative to the block.
    for d0 in range(0, d, _D_SLICE):
        d1 = min(d0 + _D_SLICE, d)
        c_part = chunks_ref[:, :, d0:d1].astype(jnp.float32)     # (t, l, ds)
        q_part = q_ref[:, d0:d1].astype(jnp.float32)             # (1, ds)
        dots = dots + jnp.sum(c_part * q_part[None], axis=-1)
        csq = csq + jnp.sum(c_part * c_part, axis=-1)
        qsq = qsq + jnp.sum(q_part * q_part, axis=-1, keepdims=True)

    # torch.nn.functional.cosine_similarity: clamp the norm *product* at eps.
    inv_norm = lax.rsqrt(jnp.maximum(csq * qsq, _EPS * _EPS))
    sims = jnp.maximum(dots * inv_norm, 0.0)                     # relu(cos_sim)
    factors = 1.0 - sims                                         # (t, l)
    if mask_tail:
        # Chunk-axis tail block: neutralize out-of-range chunk rows (factor = 1).
        cid = j * l + lax.broadcasted_iota(jnp.int32, (t, l), 1)
        factors = jnp.where(cid < num_chunks, factors, 1.0)

    prod_ref[...] = prod_ref[...] * _prod_last_axis(factors)     # (t, 1)

    @pl.when(j == pl.num_programs(1) - 1)
    def _finalize():
        semantic = 1.0 - prod_ref[...]                           # (t, 1)
        lex = lex_ref[...].astype(jnp.float32)
        z = semantic * w_ref[0] + lex * w_ref[1] + b_ref[0]
        out_ref[...] = (1.0 / (1.0 + jnp.exp(-z))).astype(out_ref.dtype)


def custom_sentence_transformer_forward(query_emb, chunk_embs, lexical_sims,
                                        lin_w, lin_b,
                                        max_block_bytes=_TARGET_BLOCK_BYTES):
    """query_emb: (1, D) or (D,); chunk_embs: (ND, NC, D); lexical_sims: (ND, 1) or
    (ND,); lin_w: (2,); lin_b: (1,).  Embedding dtype is passed through (bf16
    recommended).  Returns (ND,) combined similarity scores (f32)."""
    num_docs, num_chunks, dim = chunk_embs.shape
    q2d = query_emb.reshape(1, dim)                              # metadata-only
    lex2d = lexical_sims.reshape(num_docs, 1).astype(jnp.float32)
    w = lin_w.reshape(2).astype(jnp.float32)
    b = lin_b.reshape(1).astype(jnp.float32)

    itemsize = chunk_embs.dtype.itemsize
    tile_nd, tile_nc = _choose_tiles(num_docs, num_chunks, dim, itemsize,
                                     max_block_bytes)
    grid = (pl.cdiv(num_docs, tile_nd), pl.cdiv(num_chunks, tile_nc))
    mask_tail = (num_chunks % tile_nc) != 0

    kernel = functools.partial(_similarity_kernel,
                               num_chunks=num_chunks, mask_tail=mask_tail)

    cost = pl.CostEstimate(
        flops=int(6 * num_docs * num_chunks * dim + 8 * num_docs),
        transcendentals=int(num_docs * num_chunks + num_docs),
        bytes_accessed=int(chunk_embs.size * itemsize
                           + q2d.size * q2d.dtype.itemsize
                           + lex2d.size * 4 + num_docs * 4),
    )

    out = pl.pallas_call(
        kernel,
        out_shape=jax.ShapeDtypeStruct((num_docs, 1), jnp.float32),
        grid=grid,
        in_specs=[
            pl.BlockSpec((1, dim), lambda i, j: (0, 0)),                    # query
            pl.BlockSpec((tile_nd, tile_nc, dim), lambda i, j: (i, j, 0)),  # chunks
            pl.BlockSpec((tile_nd, 1), lambda i, j: (i, 0)),                # lexical
            pl.BlockSpec(memory_space=pltpu.MemorySpace.SMEM),              # weight
            pl.BlockSpec(memory_space=pltpu.MemorySpace.SMEM),              # bias
        ],
        out_specs=pl.BlockSpec((tile_nd, 1), lambda i, j: (i, 0)),
        scratch_shapes=[pltpu.VMEM((tile_nd, 1), jnp.float32)],
        compiler_params=pltpu.CompilerParams(
            dimension_semantics=("parallel", "arbitrary"),
            vmem_limit_bytes=_VMEM_LIMIT_BYTES),
        cost_estimate=cost,
    )(q2d, chunk_embs, lex2d, w, b)

    return out[:, 0]                        # matches .squeeze() for ND > 1


def _reference(query_emb, chunk_embs, lexical_sims, lin_w, lin_b):
    """Pure-JAX reference with torch eps semantics (clamp the norm product)."""
    q = query_emb.reshape(-1).astype(jnp.float32)
    c = chunk_embs.astype(jnp.float32)
    w12 = jnp.einsum("ncd,d->nc", c, q)
    w11 = jnp.sum(c * c, axis=-1)
    w22 = jnp.sum(q * q)
    sims = w12 / jnp.sqrt(jnp.maximum(w11 * w22, _EPS * _EPS))
    sims = jnp.maximum(sims, 0.0)
    semantic = 1.0 - jnp.prod(1.0 - sims, axis=-1)
    z = semantic * lin_w[0] + lexical_sims.reshape(-1) * lin_w[1] + lin_b[0]
    return 1.0 / (1.0 + jnp.exp(-z))


def _run_case(key, num_docs, num_chunks, dim, dtype, **kwargs):
    k_q, k_c, k_l = jax.random.split(key, 3)
    q = jax.random.normal(k_q, (1, dim), jnp.float32).astype(dtype)
    c = jax.random.normal(k_c, (num_docs, num_chunks, dim), jnp.float32).astype(dtype)
    lex = jax.random.uniform(k_l, (num_docs, 1), dtype=jnp.float32)
    w = jnp.array([0.7, -0.3], dtype=jnp.float32)     # deterministic Linear(2, 1)
    b = jnp.array([0.1], dtype=jnp.float32)

    out = jax.block_until_ready(
        custom_sentence_transformer_forward(q, c, lex, w, b, **kwargs))
    ref = _reference(q, c, lex, w, b)
    assert out.shape == (num_docs,), out.shape
    assert jnp.allclose(out, ref, atol=2e-5, rtol=1e-4), (out, ref)


if __name__ == "__main__":
    key = jax.random.PRNGKey(0)
    k1, k2, k3 = jax.random.split(key, 3)

    # Case 1: typical small problem, bf16 embeddings, single-block grid.
    _run_case(k1, num_docs=6, num_chunks=5, dim=384, dtype=jnp.bfloat16)

    # Case 2: chunk-axis tiling fallback + tail masking (tiny block budget override).
    _run_case(k2, num_docs=4, num_chunks=37, dim=256, dtype=jnp.bfloat16,
              max_block_bytes=32 * 1024)

    # Case 3: multi doc-tile grid with a partial tail block, f32 embeddings.
    _run_case(k3, num_docs=37, num_chunks=3, dim=128, dtype=jnp.float32)

    print("KERNEL_OK")
</pallas_src>

<mosaic_0001>
module attributes {stable_mosaic.version = 11 : i64} {
  func.func @_similarity_kernel(%arg0: i32, %arg1: i32, %arg2: memref<1x384xbf16, #tpu.memory_space<vmem>>, %arg3: memref<6x5x384xbf16, #tpu.memory_space<vmem>>, %arg4: memref<6x1xf32, #tpu.memory_space<vmem>>, %arg5: memref<2xf32, #tpu.memory_space<smem>>, %arg6: memref<1xf32, #tpu.memory_space<smem>>, %arg7: memref<6x1xf32, #tpu.memory_space<vmem>>, %arg8: memref<6x1xf32, #tpu.memory_space<vmem>>) attributes {dimension_semantics = [#tpu.dimension_semantics<parallel>, #tpu.dimension_semantics<arbitrary>], iteration_bounds = array<i64: 1, 1>, scalar_prefetch = 0 : i64, scratch_operands = 1 : i64, tpu.core_type = #tpu.core_type<tc>, window_params = [{pipeline_mode = #tpu.pipeline_mode<synchronous>, transform_indices = @transform_0, window_bounds = array<i64: 1, 384>}, {transform_indices = @transform_1, window_bounds = array<i64: 6, 5, 384>}, {transform_indices = @transform_2, window_bounds = array<i64: 6, 1>}, {transform_indices = @transform_3, window_bounds = array<i64: 2>}, {transform_indices = @transform_4, window_bounds = array<i64: 1>}, {transform_indices = @transform_5, window_bounds = array<i64: 6, 1>}]} {
    %c0_i32 = arith.constant 0 : i32
    %0 = arith.cmpi eq, %arg1, %c0_i32 : i32
    %1 = arith.extui %0 : i1 to i32
    %c0_i32_0 = arith.constant 0 : i32
    %2 = arith.cmpi ne, %1, %c0_i32_0 : i32
    scf.if %2 {
      %cst_33 = arith.constant 1.000000e+00 : f32
      %78 = vector.broadcast %cst_33 : f32 to vector<6x1xf32>
      %c0_34 = arith.constant 0 : index
      %c0_35 = arith.constant 0 : index
      %79 = vector.load %arg8[%c0_34, %c0_35] : memref<6x1xf32, #tpu.memory_space<vmem>>, vector<6x1xf32>
      tpu.vector_store %arg8[%c0_34, %c0_35], %78 {strides = array<i32>} : memref<6x1xf32, #tpu.memory_space<vmem>>, vector<6x1xf32>,
    } else {
    }
    %cst = arith.constant 0.000000e+00 : f32
    %3 = vector.broadcast %cst : f32 to vector<6x5xf32>
    %cst_1 = arith.constant 0.000000e+00 : f32
    %4 = vector.broadcast %cst_1 : f32 to vector<6x5xf32>
    %cst_2 = arith.constant 0.000000e+00 : f32
    %5 = vector.broadcast %cst_2 : f32 to vector<1x1xf32>
    %c0 = arith.constant 0 : index
    %c0_3 = arith.constant 0 : index
    %c0_4 = arith.constant 0 : index
    %6 = vector.load %arg3[%c0, %c0_3, %c0_4] : memref<6x5x384xbf16, #tpu.memory_space<vmem>>, vector<6x5x128xbf16>
    %7 = arith.extf %6 : vector<6x5x128xbf16> to vector<6x5x128xf32>
    %c0_5 = arith.constant 0 : index
    %c0_6 = arith.constant 0 : index
    %8 = vector.load %arg2[%c0_5, %c0_6] : memref<1x384xbf16, #tpu.memory_space<vmem>>, vector<1x128xbf16>
    %9 = arith.extf %8 : vector<1x128xbf16> to vector<1x128xf32>
    %10 = vector.shape_cast %9 : vector<1x128xf32> to vector<1x1x128xf32>
    %11 = vector.broadcast %10 : vector<1x1x128xf32> to vector<6x5x128xf32>
    %12 = arith.mulf %7, %11 : vector<6x5x128xf32>
    %cst_7 = arith.constant dense<0.000000e+00> : vector<6x5xf32>
    %13 = vector.multi_reduction <add>, %12, %cst_7 [2] : vector<6x5x128xf32> to vector<6x5xf32>
    %14 = arith.addf %3, %13 : vector<6x5xf32>
    %15 = arith.mulf %7, %7 : vector<6x5x128xf32>
    %cst_8 = arith.constant dense<0.000000e+00> : vector<6x5xf32>
    %16 = vector.multi_reduction <add>, %15, %cst_8 [2] : vector<6x5x128xf32> to vector<6x5xf32>
    %17 = arith.addf %4, %16 : vector<6x5xf32>
    %18 = arith.mulf %9, %9 : vector<1x128xf32>
    %cst_9 = arith.constant dense<0.000000e+00> : vector<1xf32>
    %19 = vector.multi_reduction <add>, %18, %cst_9 [1] : vector<1x128xf32> to vector<1xf32>
    %20 = vector.shape_cast %19 : vector<1xf32> to vector<1x1xf32>
    %21 = arith.addf %5, %20 : vector<1x1xf32>
    %c0_10 = arith.constant 0 : index
    %c0_11 = arith.constant 0 : index
    %c128 = arith.constant 128 : index
    %22 = vector.load %arg3[%c0_10, %c0_11, %c128] : memref<6x5x384xbf16, #tpu.memory_space<vmem>>, vector<6x5x128xbf16>
    %23 = arith.extf %22 : vector<6x5x128xbf16> to vector<6x5x128xf32>
    %c0_12 = arith.constant 0 : index
    %c128_13 = arith.constant 128 : index
    %24 = vector.load %arg2[%c0_12, %c128_13] : memref<1x384xbf16, #tpu.memory_space<vmem>>, vector<1x128xbf16>
    %25 = arith.extf %24 : vector<1x128xbf16> to vector<1x128xf32>
    %26 = vector.shape_cast %25 : vector<1x128xf32> to vector<1x1x128xf32>
    %27 = vector.broadcast %26 : vector<1x1x128xf32> to vector<6x5x128xf32>
    %28 = arith.mulf %23, %27 : vector<6x5x128xf32>
    %cst_14 = arith.constant dense<0.000000e+00> : vector<6x5xf32>
    %29 = vector.multi_reduction <add>, %28, %cst_14 [2] : vector<6x5x128xf32> to vector<6x5xf32>
    %30 = arith.addf %14, %29 : vector<6x5xf32>
    %31 = arith.mulf %23, %23 : vector<6x5x128xf32>
    %cst_15 = arith.constant dense<0.000000e+00> : vector<6x5xf32>
    %32 = vector.multi_reduction <add>, %31, %cst_15 [2] : vector<6x5x128xf32> to vector<6x5xf32>
    %33 = arith.addf %17, %32 : vector<6x5xf32>
    %34 = arith.mulf %25, %25 : vector<1x128xf32>
    %cst_16 = arith.constant dense<0.000000e+00> : vector<1xf32>
    %35 = vector.multi_reduction <add>, %34, %cst_16 [1] : vector<1x128xf32> to vector<1xf32>
    %36 = vector.shape_cast %35 : vector<1xf32> to vector<1x1xf32>
    %37 = arith.addf %21, %36 : vector<1x1xf32>
    %c0_17 = arith.constant 0 : index
    %c0_18 = arith.constant 0 : index
    %c256 = arith.constant 256 : index
    %38 = vector.load %arg3[%c0_17, %c0_18, %c256] : memref<6x5x384xbf16, #tpu.memory_space<vmem>>, vector<6x5x128xbf16>
    %39 = arith.extf %38 : vector<6x5x128xbf16> to vector<6x5x128xf32>
    %c0_19 = arith.constant 0 : index
    %c256_20 = arith.constant 256 : index
    %40 = vector.load %arg2[%c0_19, %c256_20] : memref<1x384xbf16, #tpu.memory_space<vmem>>, vector<1x128xbf16>
    %41 = arith.extf %40 : vector<1x128xbf16> to vector<1x128xf32>
    %42 = vector.shape_cast %41 : vector<1x128xf32> to vector<1x1x128xf32>
    %43 = vector.broadcast %42 : vector<1x1x128xf32> to vector<6x5x128xf32>
    %44 = arith.mulf %39, %43 : vector<6x5x128xf32>
    %cst_21 = arith.constant dense<0.000000e+00> : vector<6x5xf32>
    %45 = vector.multi_reduction <add>, %44, %cst_21 [2] : vector<6x5x128xf32> to vector<6x5xf32>
    %46 = arith.addf %30, %45 : vector<6x5xf32>
    %47 = arith.mulf %39, %39 : vector<6x5x128xf32>
    %cst_22 = arith.constant dense<0.000000e+00> : vector<6x5xf32>
    %48 = vector.multi_reduction <add>, %47, %cst_22 [2] : vector<6x5x128xf32> to vector<6x5xf32>
    %49 = arith.addf %33, %48 : vector<6x5xf32>
    %50 = arith.mulf %41, %41 : vector<1x128xf32>
    %cst_23 = arith.constant dense<0.000000e+00> : vector<1xf32>
    %51 = vector.multi_reduction <add>, %50, %cst_23 [1] : vector<1x128xf32> to vector<1xf32>
    %52 = vector.shape_cast %51 : vector<1xf32> to vector<1x1xf32>
    %53 = arith.addf %37, %52 : vector<1x1xf32>
    %54 = vector.broadcast %53 : vector<1x1xf32> to vector<6x5xf32>
    %55 = arith.mulf %49, %54 : vector<6x5xf32>
    %cst_24 = arith.constant 1.000000e-16 : f32
    %56 = vector.broadcast %cst_24 : f32 to vector<6x5xf32>
    %57 = arith.maximumf %55, %56 : vector<6x5xf32>
    %58 = math.rsqrt %57 : vector<6x5xf32>
    %59 = arith.mulf %46, %58 : vector<6x5xf32>
    %cst_25 = arith.constant 0.000000e+00 : f32
    %60 = vector.broadcast %cst_25 : f32 to vector<6x5xf32>
    %61 = arith.maximumf %59, %60 : vector<6x5xf32>
    %cst_26 = arith.constant 1.000000e+00 : f32
    %62 = vector.broadcast %cst_26 : f32 to vector<6x5xf32>
    %63 = arith.subf %62, %61 : vector<6x5xf32>
    %c0_27 = arith.constant 0 : index
    %c0_28 = arith.constant 0 : index
    %64 = vector.load %arg8[%c0_27, %c0_28] : memref<6x1xf32, #tpu.memory_space<vmem>>, vector<6x1xf32>
    %65 = vector.extract_strided_slice %63 {offsets = [0, 4], sizes = [6, 1], strides = [1, 1]} : vector<6x5xf32> to vector<6x1xf32>
    %66 = vector.extract_strided_slice %63 {offsets = [0, 0], sizes = [6, 2], strides = [1, 1]} : vector<6x5xf32> to vector<6x2xf32>
    %67 = vector.extract_strided_slice %63 {offsets = [0, 2], sizes = [6, 2], strides = [1, 1]} : vector<6x5xf32> to vector<6x2xf32>
    %68 = arith.mulf %66, %67 : vector<6x2xf32>
    %69 = vector.extract_strided_slice %68 {offsets = [0, 0], sizes = [6, 1], strides = [1, 1]} : vector<6x2xf32> to vector<6x1xf32>
    %70 = vector.extract_strided_slice %68 {offsets = [0, 1], sizes = [6, 1], strides = [1, 1]} : vector<6x2xf32> to vector<6x1xf32>
    %71 = arith.mulf %69, %70 : vector<6x1xf32>
    %72 = arith.mulf %71, %65 : vector<6x1xf32>
    %73 = arith.mulf %64, %72 : vector<6x1xf32>
    %c0_29 = arith.constant 0 : index
    %c0_30 = arith.constant 0 : index
    %74 = vector.load %arg8[%c0_29, %c0_30] : memref<6x1xf32, #tpu.memory_space<vmem>>, vector<6x1xf32>
    tpu.vector_store %arg8[%c0_29, %c0_30], %73 {strides = array<i32>} : memref<6x1xf32, #tpu.memory_space<vmem>>, vector<6x1xf32>,
    %c0_i32_31 = arith.constant 0 : i32
    %75 = arith.cmpi eq, %arg1, %c0_i32_31 : i32
    %76 = arith.extui %75 : i1 to i32
    %c0_i32_32 = arith.constant 0 : i32
    %77 = arith.cmpi ne, %76, %c0_i32_32 : i32
    scf.if %77 {
      %c0_33 = arith.constant 0 : index
      %c0_34 = arith.constant 0 : index
      %78 = vector.load %arg8[%c0_33, %c0_34] : memref<6x1xf32, #tpu.memory_space<vmem>>, vector<6x1xf32>
      %cst_35 = arith.constant 1.000000e+00 : f32
      %79 = vector.broadcast %cst_35 : f32 to vector<6x1xf32>
      %80 = arith.subf %79, %78 : vector<6x1xf32>
      %c0_36 = arith.constant 0 : index
      %c0_37 = arith.constant 0 : index
      %81 = vector.load %arg4[%c0_36, %c0_37] : memref<6x1xf32, #tpu.memory_space<vmem>>, vector<6x1xf32>
      %c0_38 = arith.constant 0 : index
      %82 = memref.load %arg5[%c0_38] : memref<2xf32, #tpu.memory_space<smem>>
      %83 = vector.broadcast %82 : f32 to vector<6x1xf32>
      %84 = arith.mulf %80, %83 : vector<6x1xf32>
      %c1 = arith.constant 1 : index
      %85 = memref.load %arg5[%c1] : memref<2xf32, #tpu.memory_space<smem>>
      %86 = vector.broadcast %85 : f32 to vector<6x1xf32>
      %87 = arith.mulf %81, %86 : vector<6x1xf32>
      %88 = arith.addf %84, %87 : vector<6x1xf32>
      %c0_39 = arith.constant 0 : index
      %89 = memref.load %arg6[%c0_39] : memref<1xf32, #tpu.memory_space<smem>>
      %90 = vector.broadcast %89 : f32 to vector<6x1xf32>
      %91 = arith.addf %88, %90 : vector<6x1xf32>
      %cst_40 = arith.constant 0.000000e+00 : f32
      %92 = vector.broadcast %cst_40 : f32 to vector<6x1xf32>
      %93 = arith.subf %92, %91 : vector<6x1xf32>
      %94 = math.exp %93 : vector<6x1xf32>
      %cst_41 = arith.constant 1.000000e+00 : f32
      %95 = vector.broadcast %cst_41 : f32 to vector<6x1xf32>
      %96 = arith.addf %95, %94 : vector<6x1xf32>
      %cst_42 = arith.constant 1.000000e+00 : f32
      %97 = vector.broadcast %cst_42 : f32 to vector<6x1xf32>
      %98 = arith.divf %97, %96 : vector<6x1xf32>
      %c0_43 = arith.constant 0 : index
      %c0_44 = arith.constant 0 : index
      %99 = vector.load %arg7[%c0_43, %c0_44] : memref<6x1xf32, #tpu.memory_space<vmem>>, vector<6x1xf32>
      tpu.vector_store %arg7[%c0_43, %c0_44], %98 {strides = array<i32>} : memref<6x1xf32, #tpu.memory_space<vmem>>, vector<6x1xf32>,
    } else {
    }
    return
  }
  func.func @transform_0(%arg0: i32, %arg1: i32) -> (i32, i32) {
    %c0_i32 = arith.constant 0 : i32
    %c0_i32_0 = arith.constant 0 : i32
    %c0_i32_1 = arith.constant 0 : i32
    return %c0_i32, %c0_i32_0 : i32, i32
  }
  func.func @transform_1(%arg0: i32, %arg1: i32) -> (i32, i32, i32) {
    %c0_i32 = arith.constant 0 : i32
    %c0_i32_0 = arith.constant 0 : i32
    return %arg0, %arg1, %c0_i32 : i32, i32, i32
  }
  func.func @transform_2(%arg0: i32, %arg1: i32) -> (i32, i32) {
    %c0_i32 = arith.constant 0 : i32
    %c0_i32_0 = arith.constant 0 : i32
    return %arg0, %c0_i32 : i32, i32
  }
  func.func @transform_3(%arg0: i32, %arg1: i32) -> i32 {
    %c0_i32 = arith.constant 0 : i32
    %c0_i32_0 = arith.constant 0 : i32
    return %c0_i32 : i32
  }
  func.func @transform_4(%arg0: i32, %arg1: i32) -> i32 {
    %c0_i32 = arith.constant 0 : i32
    %c0_i32_0 = arith.constant 0 : i32
    return %c0_i32 : i32
  }
  func.func @transform_5(%arg0: i32, %arg1: i32) -> (i32, i32) {
    %c0_i32 = arith.constant 0 : i32
    %c0_i32_0 = arith.constant 0 : i32
    return %arg0, %c0_i32 : i32, i32
  }
}

</mosaic_0001>

<llo_original>
// kernel: tpu_custom_call.1
$region0: #{tpu_custom_call.1}
  #allocation0 [shape = 'u32[]', space=smem, size = 0x4, offset = 0x4, fixed_abs, tag = 'smem constant byte address 0x4 - core index']
  #allocation1 [shape = 'u32[144,128]{1,0:T(1,128)}', space=vmem, size = 0x12000, scoped, tag = 'internal scratch']
  #allocation2 [shape = 'f32[6,1]{1,0:T(8,128)}', space=vmem, size = 0x1000, scoped, tag = 'scratch operand']
  #allocation3 [shape = 'f32[1]{0:T(128)S(6)}', space=smem, size = 0x200, scoped, tag = 'scoped memory for tpu_custom_call.1']
  %s0 = inlined_call_operand.vmem [shape: bf16[1,384], index: 0, kind: input, shape index: {}]
  %s1 = inlined_call_operand.vmem [shape: bf16[6,5,384], index: 1, kind: input, shape index: {}]
  %s2 = inlined_call_operand.vmem [shape: f32[6,1], index: 2, kind: input, shape index: {}]
  %s3 = inlined_call_operand.vmem [shape: f32[2], index: 3, kind: input, shape index: {}]
  %s4 = inlined_call_operand.<no memory space> [shape: f32[1], index: 4, kind: input, shape index: {}]
  %s5 = inlined_call_operand.vmem [shape: f32[6,1], index: 5, kind: output, shape index: {}]
  %s6 = sld [smem:[#allocation0]]
  $region42: #{tpu_custom_call.1} parent=0
    _
  %s8 = ssub.s32 1, %s6
  %s9 = scalar_select 0, %s8, %s6
  %10 = sst [smem:[#allocation3]] %s4
  $region1: #{tpu_custom_call.1} parent=0
    #allocation4 [shape = 'u8[512]{0}', space=smem, size = 0x200, scoped, tag = 'input window, operand 3, single buffered']
    #allocation5 [shape = 's32[1]{0}', space=sflag, size = 0x4, scoped, tag = 'scoped memory for tpu_custom_call.1']
    %11 = vsyncpa [#allocation5], 0
    // Predicated region
    $region2: #{tpu_custom_call.1} parent=1 // pred_check
      _
    $region3: #{tpu_custom_call.1} parent=1 // pred_check_branch
      %13 = sbr.rel (0) target = $region5
    $region4: #{tpu_custom_call.1} parent=1 // pred_region
      _
    $region5: #{tpu_custom_call.1} parent=1 // pred_fallthru
      _
    // Predicated region
    $region6: #{tpu_custom_call.1} parent=1 // pred_check
      _
    $region7: #{tpu_custom_call.1} parent=1 // pred_check_branch
      %15 = sbr.rel (0) target = $region9
    $region8: #{tpu_custom_call.1} parent=1 // pred_region
      _
    $region9: #{tpu_custom_call.1} parent=1 // pred_fallthru
      _
    // Predicated region
    $region10: #{tpu_custom_call.1} parent=1 // pred_check
      _
    $region11: #{tpu_custom_call.1} parent=1 // pred_check_branch
      %17 = sbr.rel (0) target = $region13
    $region12: #{tpu_custom_call.1} parent=1 // pred_region
      _
    $region13: #{tpu_custom_call.1} parent=1 // pred_fallthru
      _
    // Predicated region
    $region14: #{tpu_custom_call.1} parent=1 // pred_check
      _
    $region15: #{tpu_custom_call.1} parent=1 // pred_check_branch
      %19 = sbr.rel (0) target = $region17
    $region16: #{tpu_custom_call.1} parent=1 // pred_region
      %s21 = ssub.s32 16, 16
      %22 = vsyncadd [#allocation5], %s21
      %s24 = sshll.u32 %s3, 4
      %s25 = int_to_ptr.vmem [resolvable:$true] %s24
      %27 = dma.vmem_to_smem %s25, 16, [#allocation4], [#allocation5]
    $region17: #{tpu_custom_call.1} parent=1 // pred_fallthru
      _
    // Predicated region
    $region18: #{tpu_custom_call.1} parent=1 // pred_check
      _
    $region19: #{tpu_custom_call.1} parent=1 // pred_check_branch
      %29 = sbr.rel (0) target = $region21
    $region20: #{tpu_custom_call.1} parent=1 // pred_region
      _
    $region21: #{tpu_custom_call.1} parent=1 // pred_fallthru
      _
    // Predicated region
    $region22: #{tpu_custom_call.1} parent=1 // pred_check
      _
    $region23: #{tpu_custom_call.1} parent=1 // pred_check_branch
      %31 = sbr.rel (0) target = $region25
    $region24: #{tpu_custom_call.1} parent=1 // pred_region
      %32 = dma.done [#allocation5], 16
    $region25: #{tpu_custom_call.1} parent=1 // pred_fallthru
      _
    %33 = sfence
    %p34 = scmp.eq.s32.totalorder 0, 0
    // Predicated region
    $region26: #{tpu_custom_call.1} parent=1 // pred_check
      %p35 = pneg %p34
    $region27: #{tpu_custom_call.1} parent=1 // pred_check_branch
      %37 = sbr.rel (%p35) target = $region29
    $region28: #{tpu_custom_call.1} parent=1 // pred_region
      %vm38 = vcmask 5120
      %39 = vst.msk [vmem:[#allocation2] sm:$0x3f] %vm38, 1.0
    $region29: #{tpu_custom_call.1} parent=1 // pred_fallthru
      _
    %v40 = vld [vmem:[%s1] sm:$0x7]
    %v41 = vld [vmem:[%s1 + $0xc] sm:$0x7]
    %v42 = vld [vmem:[%s1 + $0x18] sm:$0x7]
    %v43 = vld [vmem:[%s1 + $0x24] sm:$0x7]
    %v44 = vld [vmem:[%s1 + $0x30] sm:$0x7]
    %v45 = vld [vmem:[%s1 + $0x3c] sm:$0x7]
    %v46 = vunpack.c.l.bf16 %v40
    %v47 = vunpack.c.l.bf16 %v41
    %v48 = vunpack.c.l.bf16 %v42
    %v49 = vunpack.c.l.bf16 %v43
    %v50 = vunpack.c.l.bf16 %v44
    %v51 = vunpack.c.l.bf16 %v45
    %v52 = vld [vmem:[%s0] sm:$0x1]
    %v53 = vunpack.c.l.bf16 %v52
    %v54 = vlaneseq
    %v55 = vshrl.u32 %v54, 7
    %v56 = vsub.s32 0, %v55
    %v57 = vrot.slane %v53, %v56
    %v58 = vmul.f32 %v46, %v57
    %v59 = vmul.f32 %v47, %v57
    %v60 = vmul.f32 %v48, %v57
    %v61 = vmul.f32 %v49, %v57
    %v62 = vmul.f32 %v50, %v57
    %v63 = vmul.f32 %v51, %v57
    %vm64 = vcmask 1044480
    %v65 = vsel %vm64, %v58, 0.0
    %66 = vadd.xlane.f32.xlu0 %v65
    %v67 = vpop.xlane.xlu0 %66
    %v68 = vsel %vm64, %v59, 0.0
    %69 = vadd.xlane.f32.xlu0 %v68
    %v70 = vpop.xlane.xlu0 %69
    %v71 = vsel %vm64, %v60, 0.0
    %72 = vadd.xlane.f32.xlu0 %v71
    %v73 = vpop.xlane.xlu0 %72
    %v74 = vsel %vm64, %v61, 0.0
    %75 = vadd.xlane.f32.xlu0 %v74
    %v76 = vpop.xlane.xlu0 %75
    %v77 = vsel %vm64, %v62, 0.0
    %78 = vadd.xlane.f32.xlu0 %v77
    %v79 = vpop.xlane.xlu0 %78
    %v80 = vsel %vm64, %v63, 0.0
    %81 = vadd.xlane.f32.xlu0 %v80
    %v82 = vpop.xlane.xlu0 %81
    %v83 = vadd.f32 %v67, 0.0
    %v84 = vadd.f32 %v70, 0.0
    %v85 = vadd.f32 %v73, 0.0
    %v86 = vadd.f32 %v76, 0.0
    %v87 = vadd.f32 %v79, 0.0
    %v88 = vadd.f32 %v82, 0.0
    %v89 = vmul.f32 %v46, %v46
    %v90 = vmul.f32 %v47, %v47
    %v91 = vmul.f32 %v48, %v48
    %v92 = vmul.f32 %v49, %v49
    %v93 = vmul.f32 %v50, %v50
    %v94 = vmul.f32 %v51, %v51
    %v95 = vsel %vm64, %v89, 0.0
    %96 = vadd.xlane.f32.xlu0 %v95
    %v97 = vpop.xlane.xlu0 %96
    %v98 = vsel %vm64, %v90, 0.0
    %99 = vadd.xlane.f32.xlu0 %v98
    %v100 = vpop.xlane.xlu0 %99
    %v101 = vsel %vm64, %v91, 0.0
    %102 = vadd.xlane.f32.xlu0 %v101
    %v103 = vpop.xlane.xlu0 %102
    %v104 = vsel %vm64, %v92, 0.0
    %105 = vadd.xlane.f32.xlu0 %v104
    %v106 = vpop.xlane.xlu0 %105
    %v107 = vsel %vm64, %v93, 0.0
    %108 = vadd.xlane.f32.xlu0 %v107
    %v109 = vpop.xlane.xlu0 %108
    %v110 = vsel %vm64, %v94, 0.0
    %111 = vadd.xlane.f32.xlu0 %v110
    %v112 = vpop.xlane.xlu0 %111
    %v113 = vadd.f32 %v97, 0.0
    %v114 = vadd.f32 %v100, 0.0
    %v115 = vadd.f32 %v103, 0.0
    %v116 = vadd.f32 %v106, 0.0
    %v117 = vadd.f32 %v109, 0.0
    %v118 = vadd.f32 %v112, 0.0
    %v119 = vmul.f32 %v53, %v53
    %vm120 = vcmask 1040384
    %v121 = vsel %vm120, %v119, 0.0
    %122 = vadd.xlane.f32.xlu0 %v121
    %v123 = vpop.xlane.xlu0 %122
    %v124 = vadd.f32 %v123, 0.0
    %v125 = vld [vmem:[%s1 + $0x4] sm:$0x7]
    %v126 = vld [vmem:[%s1 + $0x10] sm:$0x7]
    %v127 = vld [vmem:[%s1 + $0x1c] sm:$0x7]
    %v128 = vld [vmem:[%s1 + $0x28] sm:$0x7]
    %v129 = vld [vmem:[%s1 + $0x34] sm:$0x7]
    %v130 = vld [vmem:[%s1 + $0x40] sm:$0x7]
    %v131 = vunpack.c.l.bf16 %v125
    %v132 = vunpack.c.l.bf16 %v126
    %v133 = vunpack.c.l.bf16 %v127
    %v134 = vunpack.c.l.bf16 %v128
    %v135 = vunpack.c.l.bf16 %v129
    %v136 = vunpack.c.l.bf16 %v130
    %v137 = vld [vmem:[%s0 + $0x1] sm:$0x1]
    %v138 = vunpack.c.l.bf16 %v137
    %v139 = vlaneseq
    %v140 = vshrl.u32 %v139, 7
    %v141 = vsub.s32 0, %v140
    %v142 = vrot.slane %v138, %v141
    %v143 = vmul.f32 %v131, %v142
    %v144 = vmul.f32 %v132, %v142
    %v145 = vmul.f32 %v133, %v142
    %v146 = vmul.f32 %v134, %v142
    %v147 = vmul.f32 %v135, %v142
    %v148 = vmul.f32 %v136, %v142
    %v149 = vsel %vm64, %v143, 0.0
    %150 = vadd.xlane.f32.xlu0 %v149
    %v151 = vpop.xlane.xlu0 %150
    %v152 = vsel %vm64, %v144, 0.0
    %153 = vadd.xlane.f32.xlu0 %v152
    %v154 = vpop.xlane.xlu0 %153
    %v155 = vsel %vm64, %v145, 0.0
    %156 = vadd.xlane.f32.xlu0 %v155
    %v157 = vpop.xlane.xlu0 %156
    %v158 = vsel %vm64, %v146, 0.0
    %159 = vadd.xlane.f32.xlu0 %v158
    %v160 = vpop.xlane.xlu0 %159
    %v161 = vsel %vm64, %v147, 0.0
    %162 = vadd.xlane.f32.xlu0 %v161
    %v163 = vpop.xlane.xlu0 %162
    %v164 = vsel %vm64, %v148, 0.0
    %165 = vadd.xlane.f32.xlu0 %v164
    %v166 = vpop.xlane.xlu0 %165
    %v167 = vadd.f32 %v83, %v151
    %v168 = vadd.f32 %v84, %v154
    %v169 = vadd.f32 %v85, %v157
    %v170 = vadd.f32 %v86, %v160
    %v171 = vadd.f32 %v87, %v163
    %v172 = vadd.f32 %v88, %v166
    %v173 = vmul.f32 %v131, %v131
    %v174 = vmul.f32 %v132, %v132
    %v175 = vmul.f32 %v133, %v133
    %v176 = vmul.f32 %v134, %v134
    %v177 = vmul.f32 %v135, %v135
    %v178 = vmul.f32 %v136, %v136
    %v179 = vsel %vm64, %v173, 0.0
    %180 = vadd.xlane.f32.xlu0 %v179
    %v181 = vpop.xlane.xlu0 %180
    %v182 = vsel %vm64, %v174, 0.0
    %183 = vadd.xlane.f32.xlu0 %v182
    %v184 = vpop.xlane.xlu0 %183
    %v185 = vsel %vm64, %v175, 0.0
    %186 = vadd.xlane.f32.xlu0 %v185
    %v187 = vpop.xlane.xlu0 %186
    %v188 = vsel %vm64, %v176, 0.0
    %189 = vadd.xlane.f32.xlu0 %v188
    %v190 = vpop.xlane.xlu0 %189
    %v191 = vsel %vm64, %v177, 0.0
    %192 = vadd.xlane.f32.xlu0 %v191
    %v193 = vpop.xlane.xlu0 %192
    %v194 = vsel %vm64, %v178, 0.0
    %195 = vadd.xlane.f32.xlu0 %v194
    %v196 = vpop.xlane.xlu0 %195
    %v197 = vadd.f32 %v113, %v181
    %v198 = vadd.f32 %v114, %v184
    %v199 = vadd.f32 %v115, %v187
    %v200 = vadd.f32 %v116, %v190
    %v201 = vadd.f32 %v117, %v193
    %v202 = vadd.f32 %v118, %v196
    %v203 = vmul.f32 %v138, %v138
    %v204 = vsel %vm120, %v203, 0.0
    %205 = vadd.xlane.f32.xlu0 %v204
    %v206 = vpop.xlane.xlu0 %205
    %v207 = vadd.f32 %v124, %v206
    %v208 = vld [vmem:[%s1 + $0x8] sm:$0x7]
    %v209 = vld [vmem:[%s1 + $0x14] sm:$0x7]
    %v210 = vld [vmem:[%s1 + $0x20] sm:$0x7]
    %v211 = vld [vmem:[%s1 + $0x2c] sm:$0x7]
    %v212 = vld [vmem:[%s1 + $0x38] sm:$0x7]
    %v213 = vld [vmem:[%s1 + $0x44] sm:$0x7]
    %v214 = vunpack.c.l.bf16 %v208
    %v215 = vunpack.c.l.bf16 %v209
    %v216 = vunpack.c.l.bf16 %v210
    %v217 = vunpack.c.l.bf16 %v211
    %v218 = vunpack.c.l.bf16 %v212
    %v219 = vunpack.c.l.bf16 %v213
    %v220 = vld [vmem:[%s0 + $0x2] sm:$0x1]
    %v221 = vunpack.c.l.bf16 %v220
    %v222 = vlaneseq
    %v223 = vshrl.u32 %v222, 7
    %v224 = vsub.s32 0, %v223
    %v225 = vrot.slane %v221, %v224
    %v226 = vmul.f32 %v214, %v225
    %v227 = vmul.f32 %v215, %v225
    %v228 = vmul.f32 %v216, %v225
    %v229 = vmul.f32 %v217, %v225
    %v230 = vmul.f32 %v218, %v225
    %v231 = vmul.f32 %v219, %v225
    %v232 = vsel %vm64, %v226, 0.0
    %233 = vadd.xlane.f32.xlu0 %v232
    %v234 = vpop.xlane.xlu0 %233
    %v235 = vsel %vm64, %v227, 0.0
    %236 = vadd.xlane.f32.xlu0 %v235
    %v237 = vpop.xlane.xlu0 %236
    %v238 = vsel %vm64, %v228, 0.0
    %239 = vadd.xlane.f32.xlu0 %v238
    %v240 = vpop.xlane.xlu0 %239
    %v241 = vsel %vm64, %v229, 0.0
    %242 = vadd.xlane.f32.xlu0 %v241
    %v243 = vpop.xlane.xlu0 %242
    %v244 = vsel %vm64, %v230, 0.0
    %245 = vadd.xlane.f32.xlu0 %v244
    %v246 = vpop.xlane.xlu0 %245
    %v247 = vsel %vm64, %v231, 0.0
    %248 = vadd.xlane.f32.xlu0 %v247
    %v249 = vpop.xlane.xlu0 %248
    %v250 = vadd.f32 %v167, %v234
    %v251 = vadd.f32 %v168, %v237
    %v252 = vadd.f32 %v169, %v240
    %v253 = vadd.f32 %v170, %v243
    %v254 = vadd.f32 %v171, %v246
    %v255 = vadd.f32 %v172, %v249
    %v256 = vmul.f32 %v214, %v214
    %v257 = vmul.f32 %v215, %v215
    %v258 = vmul.f32 %v216, %v216
    %v259 = vmul.f32 %v217, %v217
    %v260 = vmul.f32 %v218, %v218
    %v261 = vmul.f32 %v219, %v219
    %v262 = vsel %vm64, %v256, 0.0
    %263 = vadd.xlane.f32.xlu0 %v262
    %v264 = vpop.xlane.xlu0 %263
    %v265 = vsel %vm64, %v257, 0.0
    %266 = vadd.xlane.f32.xlu0 %v265
    %v267 = vpop.xlane.xlu0 %266
    %v268 = vsel %vm64, %v258, 0.0
    %269 = vadd.xlane.f32.xlu0 %v268
    %v270 = vpop.xlane.xlu0 %269
    %v271 = vsel %vm64, %v259, 0.0
    %272 = vadd.xlane.f32.xlu0 %v271
    %v273 = vpop.xlane.xlu0 %272
    %v274 = vsel %vm64, %v260, 0.0
    %275 = vadd.xlane.f32.xlu0 %v274
    %v276 = vpop.xlane.xlu0 %275
    %v277 = vsel %vm64, %v261, 0.0
    %278 = vadd.xlane.f32.xlu0 %v277
    %v279 = vpop.xlane.xlu0 %278
    %v280 = vadd.f32 %v197, %v264
    %v281 = vadd.f32 %v198, %v267
    %v282 = vadd.f32 %v199, %v270
    %v283 = vadd.f32 %v200, %v273
    %v284 = vadd.f32 %v201, %v276
    %v285 = vadd.f32 %v202, %v279
    %v286 = vmul.f32 %v221, %v221
    %v287 = vsel %vm120, %v286, 0.0
    %288 = vadd.xlane.f32.xlu0 %v287
    %v289 = vpop.xlane.xlu0 %288
    %v290 = vadd.f32 %v207, %v289
    %v291 = vlaneseq
    %v292 = vshrl.u32 %v291, 7
    %v293 = vsub.s32 0, %v292
    %v294 = vrot.slane %v290, %v293
    %v295 = vmul.f32 %v280, %v294
    %v296 = vmul.f32 %v281, %v294
    %v297 = vmul.f32 %v282, %v294
    %v298 = vmul.f32 %v283, %v294
    %v299 = vmul.f32 %v284, %v294
    %v300 = vmul.f32 %v285, %v294
    %v301 = vmax.f32 %v295, 1e-16
    %v302 = vmax.f32 %v296, 1e-16
    %v303 = vmax.f32 %v297, 1e-16
    %v304 = vmax.f32 %v298, 1e-16
    %v305 = vmax.f32 %v299, 1e-16
    %v306 = vmax.f32 %v300, 1e-16
    %v307 = vrsqrt.pop %v301
    %v308 = vrsqrt.pop %v302
    %v309 = vrsqrt.pop %v303
    %v310 = vrsqrt.pop %v304
    %v311 = vrsqrt.pop %v305
    %v312 = vrsqrt.pop %v306
    %v313 = vmul.f32 %v250, %v307
    %v314 = vmul.f32 %v251, %v308
    %v315 = vmul.f32 %v252, %v309
    %v316 = vmul.f32 %v253, %v310
    %v317 = vmul.f32 %v254, %v311
    %v318 = vmul.f32 %v255, %v312
    %v319 = vmax.f32 %v313, 0.0
    %v320 = vmax.f32 %v314, 0.0
    %v321 = vmax.f32 %v315, 0.0
    %v322 = vmax.f32 %v316, 0.0
    %v323 = vmax.f32 %v317, 0.0
    %v324 = vmax.f32 %v318, 0.0
    %v325 = vsub.f32 1.0, %v319
    %v326 = vsub.f32 1.0, %v320
    %v327 = vsub.f32 1.0, %v321
    %v328 = vsub.f32 1.0, %v322
    %v329 = vsub.f32 1.0, %v323
    %v330 = vsub.f32 1.0, %v324
    %v331 = vld [vmem:[#allocation2] sm:$0x3f]
    %v338 = vrot.slane %v325, 2
    %v339 = vrot.slane %v326, 2
    %v340 = vrot.slane %v327, 2
    %v341 = vrot.slane %v328, 2
    %v342 = vrot.slane %v329, 2
    %v343 = vrot.slane %v330, 2
    %v350 = vmul.f32 %v325, %v338
    %v351 = vmul.f32 %v326, %v339
    %v352 = vmul.f32 %v327, %v340
    %v353 = vmul.f32 %v328, %v341
    %v354 = vmul.f32 %v329, %v342
    %v355 = vmul.f32 %v330, %v343
    %v362 = vrot.slane %v350, 1
    %v363 = vrot.slane %v351, 1
    %v364 = vrot.slane %v352, 1
    %v365 = vrot.slane %v353, 1
    %v366 = vrot.slane %v354, 1
    %v367 = vrot.slane %v355, 1
    %v374 = vmul.f32 %v350, %v362
    %v375 = vmul.f32 %v351, %v363
    %v376 = vmul.f32 %v352, %v364
    %v377 = vmul.f32 %v353, %v365
    %v378 = vmul.f32 %v354, %v366
    %v379 = vmul.f32 %v355, %v367
    %v380 = vrot.slane %v325, 4
    %v381 = vrot.slane %v326, 4
    %v382 = vrot.slane %v327, 4
    %v383 = vrot.slane %v328, 4
    %v384 = vrot.slane %v329, 4
    %v385 = vrot.slane %v330, 4
    %v392 = vmul.f32 %v374, %v380
    %v393 = vmul.f32 %v375, %v381
    %v394 = vmul.f32 %v376, %v382
    %v395 = vmul.f32 %v377, %v383
    %v396 = vmul.f32 %v378, %v384
    %v397 = vmul.f32 %v379, %v385
    %v404 = vrot.slane %v393, 7
    %vm405 = vcmask 1041409
    %v406 = vsel %vm405, %v404, %v392
    %v407 = vrot.slane %v394, 6
    %vm408 = vcmask 1042434
    %v409 = vsel %vm408, %v407, %v406
    %v410 = vrot.slane %v395, 5
    %vm411 = vcmask 1043459
    %v412 = vsel %vm411, %v410, %v409
    %v413 = vrot.slane %v396, 4
    %vm414 = vcmask 1044484
    %v415 = vsel %vm414, %v413, %v412
    %v416 = vrot.slane %v397, 3
    %vm417 = vcmask 1045509
    %v418 = vsel %vm417, %v416, %v415
    %v420 = vmul.f32 %v331, %v418
    %vm421 = vcmask 5120
    %422 = vst.msk [vmem:[#allocation2] sm:$0x3f] %vm421, %v420
    // Predicated region
    $region30: #{tpu_custom_call.1} parent=1 // pred_check
      %p423 = pneg %p34
    $region31: #{tpu_custom_call.1} parent=1 // pred_check_branch
      %425 = sbr.rel (%p423) target = $region33
    $region32: #{tpu_custom_call.1} parent=1 // pred_region
      %v426 = vld [vmem:[#allocation2] sm:$0x3f]
      %v427 = vsub.f32 1.0, %v426
      %v428 = vld [vmem:[%s2] sm:$0x3f]
      %s429 = sld [smem:[#allocation4]]
      %v430 = vstv %s429
      %v431 = vmul.f32 %v427, %v430
      %s432 = sld [smem:[#allocation4 + $0x1]]
      %v433 = vstv %s432
      %v434 = vmul.f32 %v428, %v433
      %v435 = vadd.f32 %v431, %v434
      %s436 = sld [smem:[#allocation3]]
      %v437 = vstv %s436
      %v438 = vadd.f32 %v435, %v437
      %v439 = vsub.f32 0.0, %v438
      %v440 = vmul.f32 %v439, 1.442695
      %v441 = vpow.pop %v440
      %v442 = vadd.f32 %v441, 1.0
      %v443 = vrcp.pop %v442
      %v444 = vmul.f32 1.0, %v443
      %445 = vst.msk [vmem:[%s5] sm:$0x3f] %vm421, %v444
    $region33: #{tpu_custom_call.1} parent=1 // pred_fallthru
      _
    // Predicated region
    $region34: #{tpu_custom_call.1} parent=1 // pred_check
      _
    $region35: #{tpu_custom_call.1} parent=1 // pred_check_branch
      %447 = sbr.rel (0) target = $region37
    $region36: #{tpu_custom_call.1} parent=1 // pred_region
      _
    $region37: #{tpu_custom_call.1} parent=1 // pred_fallthru
      _
    // Predicated region
    $region38: #{tpu_custom_call.1} parent=1 // pred_check
      _
    $region39: #{tpu_custom_call.1} parent=1 // pred_check_branch
      %449 = sbr.rel (0) target = $region41
    $region40: #{tpu_custom_call.1} parent=1 // pred_region
      _
    $region41: #{tpu_custom_call.1} parent=1 // pred_fallthru
      _
    %450 = vsyncpa [#allocation5], 1

</llo_original>
